<compile_context>
chip_gen: v7x
topology: tpu7x:2x2x1
jax: 0.10.0
libtpu: 0.0.40
codegen_flags: <defaults>
</compile_context>

<pallas_src>
import functools

import jax
import jax.numpy as jnp
from jax.experimental import pallas as pl
from jax.experimental.pallas import tpu as pltpu


def _round_up(x, m):
    return (x + m - 1) // m * m


_VMEM_LIMIT = 48 * 1024 * 1024  # safe on v5e/v6e (128 MiB) and v7x (64 MiB)


# ----------------------------------------------------------------------------
# Pallas kernels
# ----------------------------------------------------------------------------
def _mlp_kernel(x_ref, w1_ref, b1_ref, w2_ref, b2_ref, o_ref, *, matmul_dtype):
    """2-layer MLP on one row tile: (x @ W1 + b1) -> ReLU -> (@ W2 + b2).

    Matmuls run in `matmul_dtype` (bf16 by default -> full MXU rate on
    v6e/v7x) with f32 accumulation; bias add / ReLU stay in f32 on the VPU.
    """
    x = x_ref[...].astype(matmul_dtype)
    w1 = w1_ref[...].astype(matmul_dtype)
    h = jnp.dot(x, w1, preferred_element_type=jnp.float32)
    h = jnp.maximum(h + b1_ref[...], 0.0)                 # f32 elementwise
    w2 = w2_ref[...].astype(matmul_dtype)
    o = jnp.dot(h.astype(matmul_dtype), w2, preferred_element_type=jnp.float32)
    o_ref[...] = (o + b2_ref[...]).astype(o_ref.dtype)


def mlp_forward(x, w1, b1, w2, b2, *, tile_m=512, matmul_dtype=jnp.bfloat16):
    """Per-node-type MLP, row-tiled over the node dimension.

    Returns the embedding padded to a 128-wide last dim (extra columns are
    exact zeros, so downstream dot products are unchanged and lane-dense).
    """
    n, d_in = x.shape
    h_dim = w1.shape[1]
    out_dim = w2.shape[1]

    d_in_p = _round_up(d_in, 128)
    h_p = _round_up(h_dim, 128)
    out_p = _round_up(out_dim, 128)
    n_p = _round_up(max(n, 8), tile_m)

    # Zero-pad everything so MXU K/N dims and the output store are lane-dense.
    x_p = jnp.zeros((n_p, d_in_p), jnp.float32).at[:n, :d_in].set(x)
    w1_p = jnp.zeros((d_in_p, h_p), jnp.float32).at[:d_in, :h_dim].set(w1)
    b1_p = jnp.zeros((1, h_p), jnp.float32).at[0, :h_dim].set(b1)
    w2_p = jnp.zeros((h_p, out_p), jnp.float32).at[:h_dim, :out_dim].set(w2)
    b2_p = jnp.zeros((1, out_p), jnp.float32).at[0, :out_dim].set(b2)

    grid = (n_p // tile_m,)
    kernel = functools.partial(_mlp_kernel, matmul_dtype=matmul_dtype)

    flops = 2 * n_p * (d_in_p * h_p + h_p * out_p)
    bytes_accessed = 4 * (n_p * d_in_p + n_p * out_p
                          + d_in_p * h_p + h_p * out_p + h_p + out_p)

    out = pl.pallas_call(
        kernel,
        out_shape=jax.ShapeDtypeStruct((n_p, out_p), jnp.float32),
        grid=grid,
        in_specs=[
            pl.BlockSpec((tile_m, d_in_p), lambda i: (i, 0)),   # row tile of x
            pl.BlockSpec((d_in_p, h_p), lambda i: (0, 0)),      # W1 resident
            pl.BlockSpec((1, h_p), lambda i: (0, 0)),           # b1 resident
            pl.BlockSpec((h_p, out_p), lambda i: (0, 0)),       # W2 resident
            pl.BlockSpec((1, out_p), lambda i: (0, 0)),         # b2 resident
        ],
        out_specs=pl.BlockSpec((tile_m, out_p), lambda i: (i, 0)),
        compiler_params=pltpu.CompilerParams(
            dimension_semantics=("parallel",),      # shard rows across TCs
            vmem_limit_bytes=_VMEM_LIMIT),
        cost_estimate=pl.CostEstimate(
            flops=flops, transcendentals=0, bytes_accessed=bytes_accessed),
    )(x_p, w1_p, b1_p, w2_p, b2_p)

    # Keep the zero-padded columns (harmless for the dot-product decoder,
    # keeps all later loads lane-dense); drop only the padded rows.
    return out[:n, :]


def _edge_decode_kernel(src_ref, dst_ref, o_ref):
    """pred = sigmoid(sum(src_emb * dst_emb, axis=-1)) for one edge tile."""
    s = src_ref[...].astype(jnp.float32)
    d = dst_ref[...].astype(jnp.float32)
    logit = jnp.sum(s * d, axis=-1, keepdims=True)        # (TILE_E, 1)
    # TODO(synk): a (1, TILE_E) lane-dense output block would avoid the masked
    # (TILE_E, 1) store; it is hidden here because the tile is DMA-bound on
    # the 2*TILE_E*128*4B input loads.
    o_ref[...] = jax.nn.sigmoid(logit).astype(o_ref.dtype)


def edge_decode(src_emb, dst_emb, *, tile_e=1024):
    """Dot-product + sigmoid link predictor, tiled over edges."""
    e, h = src_emb.shape
    h_p = _round_up(h, 128)
    e_p = _round_up(max(e, 8), tile_e)

    src_p = jnp.zeros((e_p, h_p), jnp.float32).at[:e, :h].set(src_emb)
    dst_p = jnp.zeros((e_p, h_p), jnp.float32).at[:e, :h].set(dst_emb)

    out = pl.pallas_call(
        _edge_decode_kernel,
        out_shape=jax.ShapeDtypeStruct((e_p, 1), jnp.float32),
        grid=(e_p // tile_e,),
        in_specs=[pl.BlockSpec((tile_e, h_p), lambda i: (i, 0)),
                  pl.BlockSpec((tile_e, h_p), lambda i: (i, 0))],
        out_specs=pl.BlockSpec((tile_e, 1), lambda i: (i, 0)),
        compiler_params=pltpu.CompilerParams(
            dimension_semantics=("parallel",),
            vmem_limit_bytes=_VMEM_LIMIT),
        cost_estimate=pl.CostEstimate(
            flops=2 * e_p * h_p, transcendentals=e_p,
            bytes_accessed=4 * (2 * e_p * h_p + e_p)),
    )(src_p, dst_p)
    return out[:e, 0]                                      # (E,)


# ----------------------------------------------------------------------------
# Model: parameter init + forward
# ----------------------------------------------------------------------------
def init_params(key, node_in_dims, hidden_dim):
    """Deterministic per-node-type 2-layer MLP parameters."""
    params = {}
    for i, (ntype, d_in) in enumerate(sorted(node_in_dims.items())):
        k1, k2, k3, k4 = jax.random.split(jax.random.fold_in(key, i), 4)
        params[ntype] = {
            "w1": jax.random.normal(k1, (d_in, hidden_dim), jnp.float32)
                  * (1.0 / jnp.sqrt(d_in)),
            "b1": jax.random.normal(k2, (hidden_dim,), jnp.float32) * 0.01,
            "w2": jax.random.normal(k3, (hidden_dim, hidden_dim), jnp.float32)
                  * (1.0 / jnp.sqrt(hidden_dim)),
            "b2": jax.random.normal(k4, (hidden_dim,), jnp.float32) * 0.01,
        }
    return params


def mlp_model_forward(params, x_dict, edge_label_index_dict):
    """Equivalent of MLP_model.forward(x, edge_index, edge_label_index).

    x_dict:  {node_type: (N_t, D_t) float32}
    edge_label_index_dict: {(src_t, rel, dst_t): (2, E) int32}
    returns: {edge_type: (E,) float32 probabilities}
    """
    # encoder (hetero_MLP): per-node-type MLP, hot path in Pallas.
    z_dict = {
        ntype: mlp_forward(x, params[ntype]["w1"], params[ntype]["b1"],
                           params[ntype]["w2"], params[ntype]["b2"])
        for ntype, x in x_dict.items()
    }

    # decoder: gather (plain-JAX glue) + dot-product/sigmoid (Pallas).
    # TODO(synk): fuse the gather into the decode kernel (scalar-prefetched
    # edge indices + in-kernel DMA from z kept in HBM) to remove the extra
    # HBM round trip of materializing src_emb/dst_emb.
    pred_dict = {}
    for edge_type, eli in edge_label_index_dict.items():
        src_t, _, dst_t = edge_type
        src_emb = z_dict[src_t][eli[0]]       # (E, 128) gather in plain JAX
        dst_emb = z_dict[dst_t][eli[1]]       # (E, 128)
        pred_dict[edge_type] = edge_decode(src_emb, dst_emb)
    return pred_dict


def bce_loss(pred_dict, label_dict):
    """MLP_model.loss: summed BCE over edge types (plain JAX reference)."""
    loss = 0.0
    for edge_type, pred in pred_dict.items():
        y = label_dict[edge_type].astype(pred.dtype)
        eps = 1e-7
        p = jnp.clip(pred, eps, 1.0 - eps)
        loss += -jnp.mean(y * jnp.log(p) + (1.0 - y) * jnp.log(1.0 - p))
    return loss


# ----------------------------------------------------------------------------
# Demo
# ----------------------------------------------------------------------------
if __name__ == "__main__":
    key = jax.random.PRNGKey(0)

    # Small synthetic hetero graph: two node types, one supervision edge type.
    # Node counts chosen to exercise multiple row tiles (TILE_M=512) and
    # multiple edge tiles (TILE_E=1024).
    node_in_dims = {"user": 12, "item": 8}
    hidden_dim = 32
    n_nodes = {"user": 1037, "item": 613}
    edge_type = ("user", "rates", "item")
    num_edges = 2500

    (k_feat_u, k_feat_i, k_src, k_dst,
     k_param, k_label) = jax.random.split(key, 6)
    x_dict = {
        "user": jax.random.normal(k_feat_u, (n_nodes["user"],
                                             node_in_dims["user"]), jnp.float32),
        "item": jax.random.normal(k_feat_i, (n_nodes["item"],
                                             node_in_dims["item"]), jnp.float32),
    }
    src_idx = jax.random.randint(k_src, (num_edges,), 0, n_nodes["user"],
                                 dtype=jnp.int32)
    dst_idx = jax.random.randint(k_dst, (num_edges,), 0, n_nodes["item"],
                                 dtype=jnp.int32)
    edge_label_index = {edge_type: jnp.stack([src_idx, dst_idx], axis=0)}
    label_dict = {
        edge_type: jax.random.bernoulli(k_label, 0.5, (num_edges,))
    }

    params = init_params(k_param, node_in_dims, hidden_dim)

    pred_dict = mlp_model_forward(params, x_dict, edge_label_index)
    pred = jax.block_until_ready(pred_dict[edge_type])
    loss = jax.block_until_ready(bce_loss(pred_dict, label_dict))

    # Pure-JAX f32 reference check for the Pallas paths (kernel matmuls run
    # in bf16 -> loose tolerance).
    def ref_forward():
        z = {}
        for ntype, x in x_dict.items():
            p = params[ntype]
            h = jnp.maximum(x @ p["w1"] + p["b1"], 0.0)
            z[ntype] = h @ p["w2"] + p["b2"]
        eli = edge_label_index[edge_type]
        logits = jnp.sum(z["user"][eli[0]] * z["item"][eli[1]], axis=-1)
        return jax.nn.sigmoid(logits)

    ref = ref_forward()
    assert pred.shape == (num_edges,)
    max_err = float(jnp.max(jnp.abs(pred - ref)))
    assert max_err < 3e-2, f"max abs error {max_err}"
    assert bool(jnp.isfinite(loss))

    print("KERNEL_OK")
</pallas_src>

<mosaic_0001>
module attributes {stable_mosaic.version = 11 : i64} {
  func.func @_mlp_kernel(%arg0: i32, %arg1: memref<512x128xf32, #tpu.memory_space<vmem>>, %arg2: memref<128x128xf32, #tpu.memory_space<vmem>>, %arg3: memref<1x128xf32, #tpu.memory_space<vmem>>, %arg4: memref<128x128xf32, #tpu.memory_space<vmem>>, %arg5: memref<1x128xf32, #tpu.memory_space<vmem>>, %arg6: memref<512x128xf32, #tpu.memory_space<vmem>>) attributes {dimension_semantics = [#tpu.dimension_semantics<parallel>], iteration_bounds = array<i64: 3>, scalar_prefetch = 0 : i64, scratch_operands = 0 : i64, tpu.core_type = #tpu.core_type<tc>, window_params = [{transform_indices = @transform_0, window_bounds = array<i64: 512, 128>}, {pipeline_mode = #tpu.pipeline_mode<synchronous>, transform_indices = @transform_1, window_bounds = array<i64: 128, 128>}, {pipeline_mode = #tpu.pipeline_mode<synchronous>, transform_indices = @transform_2, window_bounds = array<i64: 1, 128>}, {pipeline_mode = #tpu.pipeline_mode<synchronous>, transform_indices = @transform_3, window_bounds = array<i64: 128, 128>}, {pipeline_mode = #tpu.pipeline_mode<synchronous>, transform_indices = @transform_4, window_bounds = array<i64: 1, 128>}, {transform_indices = @transform_5, window_bounds = array<i64: 512, 128>}]} {
    %c0 = arith.constant 0 : index
    %c0_0 = arith.constant 0 : index
    %0 = vector.load %arg1[%c0, %c0_0] : memref<512x128xf32, #tpu.memory_space<vmem>>, vector<512x128xf32>
    %1 = arith.truncf %0 : vector<512x128xf32> to vector<512x128xbf16>
    %c0_1 = arith.constant 0 : index
    %c0_2 = arith.constant 0 : index
    %2 = vector.load %arg2[%c0_1, %c0_2] : memref<128x128xf32, #tpu.memory_space<vmem>>, vector<128x128xf32>
    %3 = arith.truncf %2 : vector<128x128xf32> to vector<128x128xbf16>
    %cst = arith.constant dense<0.000000e+00> : vector<512x128xf32>
    %4 = tpu.matmul %1, %3, %cst {dimension_numbers = #tpu.dot_dimension_numbers<[1], [0], [0], [1], [0, 0, 1, 1], [], []>} : vector<512x128xbf16>, vector<128x128xbf16>, vector<512x128xf32> -> vector<512x128xf32>
    %c0_3 = arith.constant 0 : index
    %c0_4 = arith.constant 0 : index
    %5 = vector.load %arg3[%c0_3, %c0_4] : memref<1x128xf32, #tpu.memory_space<vmem>>, vector<1x128xf32>
    %6 = vector.broadcast %5 : vector<1x128xf32> to vector<512x128xf32>
    %7 = arith.addf %4, %6 : vector<512x128xf32>
    %cst_5 = arith.constant 0.000000e+00 : f32
    %8 = vector.broadcast %cst_5 : f32 to vector<512x128xf32>
    %9 = arith.maximumf %7, %8 : vector<512x128xf32>
    %c0_6 = arith.constant 0 : index
    %c0_7 = arith.constant 0 : index
    %10 = vector.load %arg4[%c0_6, %c0_7] : memref<128x128xf32, #tpu.memory_space<vmem>>, vector<128x128xf32>
    %11 = arith.truncf %10 : vector<128x128xf32> to vector<128x128xbf16>
    %12 = arith.truncf %9 : vector<512x128xf32> to vector<512x128xbf16>
    %cst_8 = arith.constant dense<0.000000e+00> : vector<512x128xf32>
    %13 = tpu.matmul %12, %11, %cst_8 {dimension_numbers = #tpu.dot_dimension_numbers<[1], [0], [0], [1], [0, 0, 1, 1], [], []>} : vector<512x128xbf16>, vector<128x128xbf16>, vector<512x128xf32> -> vector<512x128xf32>
    %c0_9 = arith.constant 0 : index
    %c0_10 = arith.constant 0 : index
    %14 = vector.load %arg5[%c0_9, %c0_10] : memref<1x128xf32, #tpu.memory_space<vmem>>, vector<1x128xf32>
    %15 = vector.broadcast %14 : vector<1x128xf32> to vector<512x128xf32>
    %16 = arith.addf %13, %15 : vector<512x128xf32>
    %c0_11 = arith.constant 0 : index
    %c0_12 = arith.constant 0 : index
    %17 = vector.load %arg6[%c0_11, %c0_12] : memref<512x128xf32, #tpu.memory_space<vmem>>, vector<512x128xf32>
    tpu.vector_store %arg6[%c0_11, %c0_12], %16 {strides = array<i32>} : memref<512x128xf32, #tpu.memory_space<vmem>>, vector<512x128xf32>,
    return
  }
  func.func @transform_0(%arg0: i32) -> (i32, i32) {
    %c0_i32 = arith.constant 0 : i32
    %c0_i32_0 = arith.constant 0 : i32
    return %arg0, %c0_i32 : i32, i32
  }
  func.func @transform_1(%arg0: i32) -> (i32, i32) {
    %c0_i32 = arith.constant 0 : i32
    %c0_i32_0 = arith.constant 0 : i32
    %c0_i32_1 = arith.constant 0 : i32
    return %c0_i32, %c0_i32_0 : i32, i32
  }
  func.func @transform_2(%arg0: i32) -> (i32, i32) {
    %c0_i32 = arith.constant 0 : i32
    %c0_i32_0 = arith.constant 0 : i32
    %c0_i32_1 = arith.constant 0 : i32
    return %c0_i32, %c0_i32_0 : i32, i32
  }
  func.func @transform_3(%arg0: i32) -> (i32, i32) {
    %c0_i32 = arith.constant 0 : i32
    %c0_i32_0 = arith.constant 0 : i32
    %c0_i32_1 = arith.constant 0 : i32
    return %c0_i32, %c0_i32_0 : i32, i32
  }
  func.func @transform_4(%arg0: i32) -> (i32, i32) {
    %c0_i32 = arith.constant 0 : i32
    %c0_i32_0 = arith.constant 0 : i32
    %c0_i32_1 = arith.constant 0 : i32
    return %c0_i32, %c0_i32_0 : i32, i32
  }
  func.func @transform_5(%arg0: i32) -> (i32, i32) {
    %c0_i32 = arith.constant 0 : i32
    %c0_i32_0 = arith.constant 0 : i32
    return %arg0, %c0_i32 : i32, i32
  }
}

</mosaic_0001>

<llo_original>
// kernel: tpu_custom_call.1
$region0: #{tpu_custom_call.1}
  #allocation0 [shape = 'u32[]', space=smem, size = 0x4, offset = 0x4, fixed_abs, tag = 'smem constant byte address 0x4 - core index']
  #allocation1 [shape = 'u32[144,128]{1,0:T(1,128)}', space=vmem, size = 0x12000, scoped, tag = 'internal scratch']
  %s0 = inlined_call_operand.hbm [shape: f32[1536,128], index: 0, kind: input, shape index: {}]
  %s1 = inlined_call_operand.hbm [shape: f32[128,128], index: 1, kind: input, shape index: {}]
  %s2 = inlined_call_operand.vmem [shape: f32[1,128], index: 2, kind: input, shape index: {}]
  %s3 = inlined_call_operand.hbm [shape: f32[128,128], index: 3, kind: input, shape index: {}]
  %s4 = inlined_call_operand.vmem [shape: f32[1,128], index: 4, kind: input, shape index: {}]
  %s5 = inlined_call_operand.hbm [shape: f32[1536,128], index: 5, kind: output, shape index: {}]
  %s6 = sld [smem:[#allocation0]]
  $region65: #{tpu_custom_call.1} parent=0
    _
  %s8 = ssub.s32 1, %s6
  %s9 = scalar_select 0, %s8, %s6
  $region1: #{tpu_custom_call.1} parent=0
    #allocation2 [shape = 'u8[524288]{0}', space=vmem, size = 0x80000, scoped, tag = 'input window, operand 0']
    #allocation3 [shape = 's32[2]{0}', space=sflag, size = 0x8, scoped, tag = 'scoped memory for tpu_custom_call.1']
    #allocation4 [shape = 's32[2]{0}', space=sflag, size = 0x8, scoped, tag = 'scoped memory for tpu_custom_call.1']
    #allocation5 [shape = 'u8[65536]{0}', space=vmem, size = 0x10000, scoped, tag = 'input window, operand 1, single buffered']
    #allocation6 [shape = 's32[1]{0}', space=sflag, size = 0x4, scoped, tag = 'scoped memory for tpu_custom_call.1']
    #allocation7 [shape = 'u8[65536]{0}', space=vmem, size = 0x10000, scoped, tag = 'input window, operand 3, single buffered']
    #allocation8 [shape = 'u8[524288]{0}', space=vmem, size = 0x80000, scoped, tag = 'output window, operand 0']
    %10 = vsyncpa [#allocation3], 0
    %s11 = scalar_lea.sflag [#allocation3], 1
    %12 = vsyncpa %s11, 0
    %13 = vsyncpa [#allocation6], 0
    %14 = vsyncpa [#allocation4], 0
    %s15 = scalar_lea.sflag [#allocation4], 1
    %16 = vsyncpa %s15, 0
    loop: start=0, step=1, limit=5
    $region2: #{tpu_custom_call.1} parent=1 // loop_pre_header
      _
    $region3: #{tpu_custom_call.1} parent=1 // loop_header
      %s18 = sphi 0, %s22
      %p19 = scmp.ge.s32.totalorder %s18, 5
      %s28 = sphi 0, %s30
      %s31 = sphi 0, %s28
      %s32 = sphi 0, %s31
      %s48 = sphi 0, %s32
      %s52 = sphi 0, %s52
      %s54 = sphi 0, %s52
      %s55 = sphi 0, %s54
      %s69 = sphi 0, %s55
      %s73 = sphi 0, %s73
      %s75 = sphi 0, %s73
      %s76 = sphi 0, %s75
      %s90 = sphi 0, %s76
      %s94 = sphi 0, %s94
      %s96 = sphi 0, %s94
      %s97 = sphi 0, %s96
      %s111 = sphi 0, %s97
      %s115 = sphi 0, %s115
      %s117 = sphi 0, %s115
      %s118 = sphi 0, %s117
      %s132 = sphi 0, %s118
      %s138 = sphi 0, %s140
      %s141 = sphi 0, %s138
      %s142 = sphi 0, %s141
      %s158 = sphi 0, %s142
    $region4: #{tpu_custom_call.1} parent=1 // loop_header_branch
      %21 = sbr.rel (%p19) target = $region8
    $region5: #{tpu_custom_call.1} parent=1 // loop_body
      %s23 = ssub.s32 %s18, 1
      %s24 = ssub.s32 %s18, 2
      %s25 = sadd.s32 %s18, 1
      %s26 = ssub.s32 %s18, %s25
      %p27 = scmp.eq.s32.totalorder %s26, 0
      %s29 = sadd.s32 %s28, 1
      %s30 = scalar_select %p27, %s28, %s29
      %p33 = pneg %p27
      %p34 = scmp.eq.s32.totalorder %s18, 2
      %p35 = por %p33, %p34
      %p36 = scmp.ne.s32.totalorder %s28, %s31
      %p37 = scmp.eq.s32.totalorder %s18, 0
      %p38 = por %p36, %p37
      %p39 = scmp.ne.s32.totalorder %s28, %s31
      %p40 = scmp.eq.s32.totalorder %s23, 2
      %p41 = por %p39, %p40
      %p42 = scmp.ne.s32.totalorder %s31, %s32
      %p43 = scmp.eq.s32.totalorder %s23, 0
      %p44 = por %p42, %p43
      %p45 = scmp.ne.s32.totalorder %s31, %s32
      %p46 = scmp.eq.s32.totalorder %s24, 2
      %p47 = por %p45, %p46
      %p49 = scmp.ne.s32.totalorder %s32, %s48
      %p50 = scmp.eq.s32.totalorder %s24, 0
      %p51 = por %p49, %p50
      %s53 = sadd.s32 %s52, 1
      %p56 = scmp.eq.s32.totalorder %s18, 2
      %p57 = scmp.ne.s32.totalorder %s52, %s54
      %p58 = scmp.eq.s32.totalorder %s18, 0
      %p59 = por %p57, %p58
      %p60 = scmp.ne.s32.totalorder %s52, %s54
      %p61 = scmp.eq.s32.totalorder %s23, 2
      %p62 = por %p60, %p61
      %p63 = scmp.ne.s32.totalorder %s54, %s55
      %p64 = scmp.eq.s32.totalorder %s23, 0
      %p65 = por %p63, %p64
      %p66 = scmp.ne.s32.totalorder %s54, %s55
      %p67 = scmp.eq.s32.totalorder %s24, 2
      %p68 = por %p66, %p67
      %p70 = scmp.ne.s32.totalorder %s55, %s69
      %p71 = scmp.eq.s32.totalorder %s24, 0
      %p72 = por %p70, %p71
      %s74 = sadd.s32 %s73, 1
      %p77 = scmp.eq.s32.totalorder %s18, 2
      %p78 = scmp.ne.s32.totalorder %s73, %s75
      %p79 = scmp.eq.s32.totalorder %s18, 0
      %p80 = por %p78, %p79
      %p81 = scmp.ne.s32.totalorder %s73, %s75
      %p82 = scmp.eq.s32.totalorder %s23, 2
      %p83 = por %p81, %p82
      %p84 = scmp.ne.s32.totalorder %s75, %s76
      %p85 = scmp.eq.s32.totalorder %s23, 0
      %p86 = por %p84, %p85
      %p87 = scmp.ne.s32.totalorder %s75, %s76
      %p88 = scmp.eq.s32.totalorder %s24, 2
      %p89 = por %p87, %p88
      %p91 = scmp.ne.s32.totalorder %s76, %s90
      %p92 = scmp.eq.s32.totalorder %s24, 0
      %p93 = por %p91, %p92
      %s95 = sadd.s32 %s94, 1
      %p98 = scmp.eq.s32.totalorder %s18, 2
      %p99 = scmp.ne.s32.totalorder %s94, %s96
      %p100 = scmp.eq.s32.totalorder %s18, 0
      %p101 = por %p99, %p100
      %p102 = scmp.ne.s32.totalorder %s94, %s96
      %p103 = scmp.eq.s32.totalorder %s23, 2
      %p104 = por %p102, %p103
      %p105 = scmp.ne.s32.totalorder %s96, %s97
      %p106 = scmp.eq.s32.totalorder %s23, 0
      %p107 = por %p105, %p106
      %p108 = scmp.ne.s32.totalorder %s96, %s97
      %p109 = scmp.eq.s32.totalorder %s24, 2
      %p110 = por %p108, %p109
      %p112 = scmp.ne.s32.totalorder %s97, %s111
      %p113 = scmp.eq.s32.totalorder %s24, 0
      %p114 = por %p112, %p113
      %s116 = sadd.s32 %s115, 1
      %p119 = scmp.eq.s32.totalorder %s18, 2
      %p120 = scmp.ne.s32.totalorder %s115, %s117
      %p121 = scmp.eq.s32.totalorder %s18, 0
      %p122 = por %p120, %p121
      %p123 = scmp.ne.s32.totalorder %s115, %s117
      %p124 = scmp.eq.s32.totalorder %s23, 2
      %p125 = por %p123, %p124
      %p126 = scmp.ne.s32.totalorder %s117, %s118
      %p127 = scmp.eq.s32.totalorder %s23, 0
      %p128 = por %p126, %p127
      %p129 = scmp.ne.s32.totalorder %s117, %s118
      %p130 = scmp.eq.s32.totalorder %s24, 2
      %p131 = por %p129, %p130
      %p133 = scmp.ne.s32.totalorder %s118, %s132
      %p134 = scmp.eq.s32.totalorder %s24, 0
      %p135 = por %p133, %p134
      %s136 = ssub.s32 %s18, %s25
      %p137 = scmp.eq.s32.totalorder %s136, 0
      %s139 = sadd.s32 %s138, 1
      %s140 = scalar_select %p137, %s138, %s139
      %p143 = pneg %p137
      %p144 = scmp.eq.s32.totalorder %s18, 2
      %p145 = por %p143, %p144
      %p146 = scmp.ne.s32.totalorder %s138, %s141
      %p147 = scmp.eq.s32.totalorder %s18, 0
      %p148 = por %p146, %p147
      %p149 = scmp.ne.s32.totalorder %s138, %s141
      %p150 = scmp.eq.s32.totalorder %s23, 2
      %p151 = por %p149, %p150
      %p152 = scmp.ne.s32.totalorder %s141, %s142
      %p153 = scmp.eq.s32.totalorder %s23, 0
      %p154 = por %p152, %p153
      %p155 = scmp.ne.s32.totalorder %s141, %s142
      %p156 = scmp.eq.s32.totalorder %s24, 2
      %p157 = por %p155, %p156
      %p159 = scmp.ne.s32.totalorder %s142, %s158
      %p160 = scmp.eq.s32.totalorder %s24, 0
      %p161 = por %p159, %p160
      %p162 = scmp.le.s32.totalorder 1, %s18
      %p163 = scmp.lt.s32.totalorder %s18, 4
      %p164 = pnand %p162, %p163
      %p165 = pneg %p164
      // Predicated region
      $region9: #{tpu_custom_call.1} parent=5 // pred_check
        _
      $region10: #{tpu_custom_call.1} parent=5 // pred_check_branch
        %167 = sbr.rel (%p164) target = $region12
      $region11: #{tpu_custom_call.1} parent=5 // pred_region
        %s168 = ssub.s32 %s18, 1
        // Predicated region
        $region13: #{tpu_custom_call.1} parent=11 // pred_check
          %p169 = pneg %p65
        $region14: #{tpu_custom_call.1} parent=11 // pred_check_branch
          %171 = sbr.rel (%p169) target = $region16
        $region15: #{tpu_custom_call.1} parent=11 // pred_region
          %s173 = ssub.s32 2048, 2048
          %174 = vsyncadd [#allocation6], %s173
          %s175 = sshll.u32 [#allocation5], 4
          %s176 = int_to_ptr.vmem [resolvable:$true] %s175
          %181 = dma.hbm_to_vmem [thread:$0]  %s1, 2048, %s176, [#allocation6], 128, 128, 8
        $region16: #{tpu_custom_call.1} parent=11 // pred_fallthru
          _
        // Predicated region
        $region17: #{tpu_custom_call.1} parent=11 // pred_check
          %p182 = pneg %p86
        $region18: #{tpu_custom_call.1} parent=11 // pred_check_branch
          %184 = sbr.rel (%p182) target = $region20
        $region19: #{tpu_custom_call.1} parent=11 // pred_region
          _
        $region20: #{tpu_custom_call.1} parent=11 // pred_fallthru
          _
        // Predicated region
        $region21: #{tpu_custom_call.1} parent=11 // pred_check
          %p185 = pneg %p107
        $region22: #{tpu_custom_call.1} parent=11 // pred_check_branch
          %187 = sbr.rel (%p185) target = $region24
        $region23: #{tpu_custom_call.1} parent=11 // pred_region
          %s189 = ssub.s32 2048, 2048
          %190 = vsyncadd [#allocation6], %s189
          %s191 = sshll.u32 [#allocation7], 4
          %s192 = int_to_ptr.vmem [resolvable:$true] %s191
          %197 = dma.hbm_to_vmem [thread:$0]  %s3, 2048, %s192, [#allocation6], 128, 128, 8
        $region24: #{tpu_custom_call.1} parent=11 // pred_fallthru
          _
        // Predicated region
        $region25: #{tpu_custom_call.1} parent=11 // pred_check
          %p198 = pneg %p128
        $region26: #{tpu_custom_call.1} parent=11 // pred_check_branch
          %200 = sbr.rel (%p198) target = $region28
        $region27: #{tpu_custom_call.1} parent=11 // pred_region
          _
        $region28: #{tpu_custom_call.1} parent=11 // pred_fallthru
          _
      $region12: #{tpu_custom_call.1} parent=5 // pred_fallthru
        _
      %p201 = scmp.lt.s32.totalorder %s18, 3
      // Predicated region
      $region29: #{tpu_custom_call.1} parent=5 // pred_check
        %p202 = pneg %p201
      $region30: #{tpu_custom_call.1} parent=5 // pred_check_branch
        %204 = sbr.rel (%p202) target = $region32
      $region31: #{tpu_custom_call.1} parent=5 // pred_region
        // Predicated region
        $region33: #{tpu_custom_call.1} parent=31 // pred_check
          %p205 = pneg %p38
        $region34: #{tpu_custom_call.1} parent=31 // pred_check_branch
          %207 = sbr.rel (%p205) target = $region36
        $region35: #{tpu_custom_call.1} parent=31 // pred_region
          %s208 = sand.u32 %s28, 1
          %s209 = scalar_lea.sflag [#allocation3], %s208
          %s210 = sand.u32 %s28, 1
          %s211 = smul.addr %s210, 512
          %s212 = scalar_lea.vmem [#allocation2], %s211
          %s213 = smul.u32 64, %s18
          %s215 = ssub.s32 8192, 8192
          %216 = vsyncadd %s209, %s215
          %s217 = smul.addr %s213, 128
          %s218 = scalar_lea.hbm %s0, %s217
          %s219 = sshll.u32 %s212, 4
          %s220 = int_to_ptr.vmem [resolvable:$true] %s219
          %225 = dma.hbm_to_vmem [thread:$0]  %s218, 8192, %s220, %s209, 128, 128, 8
        $region36: #{tpu_custom_call.1} parent=31 // pred_fallthru
          _
      $region32: #{tpu_custom_call.1} parent=5 // pred_fallthru
        _
      %p226 = scmp.le.s32.totalorder 1, %s18
      %p227 = scmp.lt.s32.totalorder %s18, 4
      %p228 = pnand %p226, %p227
      %p229 = pneg %p228
      // Predicated region
      $region37: #{tpu_custom_call.1} parent=5 // pred_check
        _
      $region38: #{tpu_custom_call.1} parent=5 // pred_check_branch
        %231 = sbr.rel (%p228) target = $region40
      $region39: #{tpu_custom_call.1} parent=5 // pred_region
        %s232 = ssub.s32 %s18, 1
        %s233 = sand.u32 %s31, 1
        %s234 = scalar_lea.sflag [#allocation3], %s233
        %s235 = sand.u32 %s31, 1
        %s236 = smul.addr %s235, 512
        %s237 = scalar_lea.vmem [#allocation2], %s236
        // Predicated region
        $region41: #{tpu_custom_call.1} parent=39 // pred_check
          %p238 = pneg %p44
        $region42: #{tpu_custom_call.1} parent=39 // pred_check_branch
          %240 = sbr.rel (%p238) target = $region44
        $region43: #{tpu_custom_call.1} parent=39 // pred_region
          %241 = dma.done %s234, 8192
        $region44: #{tpu_custom_call.1} parent=39 // pred_fallthru
          _
        // Predicated region
        $region45: #{tpu_custom_call.1} parent=39 // pred_check
          %p242 = pneg %p65
        $region46: #{tpu_custom_call.1} parent=39 // pred_check_branch
          %244 = sbr.rel (%p242) target = $region48
        $region47: #{tpu_custom_call.1} parent=39 // pred_region
          %245 = dma.done [#allocation6], 2048
        $region48: #{tpu_custom_call.1} parent=39 // pred_fallthru
          _
        // Predicated region
        $region49: #{tpu_custom_call.1} parent=39 // pred_check
          %p246 = pneg %p107
        $region50: #{tpu_custom_call.1} parent=39 // pred_check_branch
          %248 = sbr.rel (%p246) target = $region52
        $region51: #{tpu_custom_call.1} parent=39 // pred_region
          %249 = dma.done [#allocation6], 2048
        $region52: #{tpu_custom_call.1} parent=39 // pred_fallthru
          _
        %s250 = sand.u32 %s31, 1
        %s251 = scalar_lea.sflag [#allocation3], %s250
        %s252 = sand.u32 %s31, 1
        %s253 = smul.addr %s252, 512
        %s254 = scalar_lea.vmem [#allocation2], %s253
        %p255 = pneg %p44
        %p256 = pneg %p41
        %p257 = pneg %p65
        %p258 = pneg %p62
        %p259 = pneg %p86
        %p260 = pneg %p83
        %p261 = pneg %p107
        %p262 = pneg %p104
        %p263 = pneg %p128
        %p264 = pneg %p125
        %p265 = pneg %p154
        %p266 = pneg %p151
        %s267 = sand.u32 %s141, 1
        %s268 = scalar_lea.sflag [#allocation4], %s267
        %s269 = sand.u32 %s141, 1
        %s270 = smul.addr %s269, 512
        %s271 = scalar_lea.vmem [#allocation8], %s270
        %s272 = smul.u32 64, %s23
        %s273 = smul.u32 64, %s23
        %v275 = vld [vmem:[%s237] sm:$0xff]
        %v276 = vld [vmem:[%s237 + $0x8] sm:$0xff]
        %v277 = vld [vmem:[%s237 + $0x10] sm:$0xff]
        %v278 = vld [vmem:[%s237 + $0x18] sm:$0xff]
        %v279 = vld [vmem:[%s237 + $0x20] sm:$0xff]
        %v280 = vld [vmem:[%s237 + $0x28] sm:$0xff]
        %v281 = vld [vmem:[%s237 + $0x30] sm:$0xff]
        %v282 = vld [vmem:[%s237 + $0x38] sm:$0xff]
        %v283 = vld [vmem:[%s237 + $0x40] sm:$0xff]
        %v284 = vld [vmem:[%s237 + $0x48] sm:$0xff]
        %v285 = vld [vmem:[%s237 + $0x50] sm:$0xff]
        %v286 = vld [vmem:[%s237 + $0x58] sm:$0xff]
        %v287 = vld [vmem:[%s237 + $0x60] sm:$0xff]
        %v288 = vld [vmem:[%s237 + $0x68] sm:$0xff]
        %v289 = vld [vmem:[%s237 + $0x70] sm:$0xff]
        %v290 = vld [vmem:[%s237 + $0x78] sm:$0xff]
        %v291 = vld [vmem:[%s237 + $0x80] sm:$0xff]
        %v292 = vld [vmem:[%s237 + $0x88] sm:$0xff]
        %v293 = vld [vmem:[%s237 + $0x90] sm:$0xff]
        %v294 = vld [vmem:[%s237 + $0x98] sm:$0xff]
        %v295 = vld [vmem:[%s237 + $0xa0] sm:$0xff]
        %v296 = vld [vmem:[%s237 + $0xa8] sm:$0xff]
        %v297 = vld [vmem:[%s237 + $0xb0] sm:$0xff]
        %v298 = vld [vmem:[%s237 + $0xb8] sm:$0xff]
        %v299 = vld [vmem:[%s237 + $0xc0] sm:$0xff]
        %v300 = vld [vmem:[%s237 + $0xc8] sm:$0xff]
        %v301 = vld [vmem:[%s237 + $0xd0] sm:$0xff]
        %v302 = vld [vmem:[%s237 + $0xd8] sm:$0xff]
        %v303 = vld [vmem:[%s237 + $0xe0] sm:$0xff]
        %v304 = vld [vmem:[%s237 + $0xe8] sm:$0xff]
        %v305 = vld [vmem:[%s237 + $0xf0] sm:$0xff]
        %v306 = vld [vmem:[%s237 + $0xf8] sm:$0xff]
        %v307 = vld [vmem:[%s237 + $0x100] sm:$0xff]
        %v308 = vld [vmem:[%s237 + $0x108] sm:$0xff]
        %v309 = vld [vmem:[%s237 + $0x110] sm:$0xff]
        %v310 = vld [vmem:[%s237 + $0x118] sm:$0xff]
        %v311 = vld [vmem:[%s237 + $0x120] sm:$0xff]
        %v312 = vld [vmem:[%s237 + $0x128] sm:$0xff]
        %v313 = vld [vmem:[%s237 + $0x130] sm:$0xff]
        %v314 = vld [vmem:[%s237 + $0x138] sm:$0xff]
        %v315 = vld [vmem:[%s237 + $0x140] sm:$0xff]
        %v316 = vld [vmem:[%s237 + $0x148] sm:$0xff]
        %v317 = vld [vmem:[%s237 + $0x150] sm:$0xff]
        %v318 = vld [vmem:[%s237 + $0x158] sm:$0xff]
        %v319 = vld [vmem:[%s237 + $0x160] sm:$0xff]
        %v320 = vld [vmem:[%s237 + $0x168] sm:$0xff]
        %v321 = vld [vmem:[%s237 + $0x170] sm:$0xff]
        %v322 = vld [vmem:[%s237 + $0x178] sm:$0xff]
        %v323 = vld [vmem:[%s237 + $0x180] sm:$0xff]
        %v324 = vld [vmem:[%s237 + $0x188] sm:$0xff]
        %v325 = vld [vmem:[%s237 + $0x190] sm:$0xff]
        %v326 = vld [vmem:[%s237 + $0x198] sm:$0xff]
        %v327 = vld [vmem:[%s237 + $0x1a0] sm:$0xff]
        %v328 = vld [vmem:[%s237 + $0x1a8] sm:$0xff]
        %v329 = vld [vmem:[%s237 + $0x1b0] sm:$0xff]
        %v330 = vld [vmem:[%s237 + $0x1b8] sm:$0xff]
        %v331 = vld [vmem:[%s237 + $0x1c0] sm:$0xff]
        %v332 = vld [vmem:[%s237 + $0x1c8] sm:$0xff]
        %v333 = vld [vmem:[%s237 + $0x1d0] sm:$0xff]
        %v334 = vld [vmem:[%s237 + $0x1d8] sm:$0xff]
        %v335 = vld [vmem:[%s237 + $0x1e0] sm:$0xff]
        %v336 = vld [vmem:[%s237 + $0x1e8] sm:$0xff]
        %v337 = vld [vmem:[%s237 + $0x1f0] sm:$0xff]
        %v338 = vld [vmem:[%s237 + $0x1f8] sm:$0xff]
        %v339 = vpack.c.bf16 %v276, %v275
        %v340 = vpack.c.bf16 %v278, %v277
        %v341 = vpack.c.bf16 %v280, %v279
        %v342 = vpack.c.bf16 %v282, %v281
        %v343 = vpack.c.bf16 %v284, %v283
        %v344 = vpack.c.bf16 %v286, %v285
        %v345 = vpack.c.bf16 %v288, %v287
        %v346 = vpack.c.bf16 %v290, %v289
        %v347 = vpack.c.bf16 %v292, %v291
        %v348 = vpack.c.bf16 %v294, %v293
        %v349 = vpack.c.bf16 %v296, %v295
        %v350 = vpack.c.bf16 %v298, %v297
        %v351 = vpack.c.bf16 %v300, %v299
        %v352 = vpack.c.bf16 %v302, %v301
        %v353 = vpack.c.bf16 %v304, %v303
        %v354 = vpack.c.bf16 %v306, %v305
        %v355 = vpack.c.bf16 %v308, %v307
        %v356 = vpack.c.bf16 %v310, %v309
        %v357 = vpack.c.bf16 %v312, %v311
        %v358 = vpack.c.bf16 %v314, %v313
        %v359 = vpack.c.bf16 %v316, %v315
        %v360 = vpack.c.bf16 %v318, %v317
        %v361 = vpack.c.bf16 %v320, %v319
        %v362 = vpack.c.bf16 %v322, %v321
        %v363 = vpack.c.bf16 %v324, %v323
        %v364 = vpack.c.bf16 %v326, %v325
        %v365 = vpack.c.bf16 %v328, %v327
        %v366 = vpack.c.bf16 %v330, %v329
        %v367 = vpack.c.bf16 %v332, %v331
        %v368 = vpack.c.bf16 %v334, %v333
        %v369 = vpack.c.bf16 %v336, %v335
        %v370 = vpack.c.bf16 %v338, %v337
        %v371 = vld [vmem:[#allocation5] sm:$0xff]
        %v372 = vld [vmem:[#allocation5 + $0x8] sm:$0xff]
        %v373 = vld [vmem:[#allocation5 + $0x10] sm:$0xff]
        %v374 = vld [vmem:[#allocation5 + $0x18] sm:$0xff]
        %v375 = vld [vmem:[#allocation5 + $0x20] sm:$0xff]
        %v376 = vld [vmem:[#allocation5 + $0x28] sm:$0xff]
        %v377 = vld [vmem:[#allocation5 + $0x30] sm:$0xff]
        %v378 = vld [vmem:[#allocation5 + $0x38] sm:$0xff]
        %v379 = vld [vmem:[#allocation5 + $0x40] sm:$0xff]
        %v380 = vld [vmem:[#allocation5 + $0x48] sm:$0xff]
        %v381 = vld [vmem:[#allocation5 + $0x50] sm:$0xff]
        %v382 = vld [vmem:[#allocation5 + $0x58] sm:$0xff]
        %v383 = vld [vmem:[#allocation5 + $0x60] sm:$0xff]
        %v384 = vld [vmem:[#allocation5 + $0x68] sm:$0xff]
        %v385 = vld [vmem:[#allocation5 + $0x70] sm:$0xff]
        %v386 = vld [vmem:[#allocation5 + $0x78] sm:$0xff]
        %v387 = vpack.c.bf16 %v372, %v371
        %v388 = vpack.c.bf16 %v374, %v373
        %v389 = vpack.c.bf16 %v376, %v375
        %v390 = vpack.c.bf16 %v378, %v377
        %v391 = vpack.c.bf16 %v380, %v379
        %v392 = vpack.c.bf16 %v382, %v381
        %v393 = vpack.c.bf16 %v384, %v383
        %v394 = vpack.c.bf16 %v386, %v385
        %v395 = vld [vmem:[%s2] sm:$0x1]
        %v397 = vlaneseq
        %v398 = vshrl.u32 %v397, 7
        %v399 = vsub.s32 0, %v398
        %v400 = vrot.slane %v395, %v399
        %402 = vmatprep.subr.bf16.mxu0 0
        %403 = vmatpush1.bf16.msra.mxu0 %v387
        %404 = vmatprep.subr.bf16.mxu0 0
        %405 = vmatpush1.bf16.msra.mxu0 %v388
        %406 = vmatprep.subr.bf16.mxu0 0
        %407 = vmatpush1.bf16.msra.mxu0 %v389
        %408 = vmatprep.subr.bf16.mxu0 0
        %409 = vmatpush1.bf16.msra.mxu0 %v390
        %410 = vmatprep.subr.bf16.mxu0 0
        %411 = vmatpush1.bf16.msra.mxu0 %v391
        %412 = vmatprep.subr.bf16.mxu0 0
        %413 = vmatpush1.bf16.msra.mxu0 %v392
        %414 = vmatprep.subr.bf16.mxu0 0
        %415 = vmatpush1.bf16.msra.mxu0 %v393
        %416 = vmatprep.subr.bf16.mxu0 0
        %417 = vmatpush1.bf16.msra.mxu0 %v394
        %418 = vmatprep.subr.bf16.mxu0 0
        %419 = vmatpush1.bf16.msra.mxu0 0
        %420 = vmatprep.subr.bf16.mxu0 0
        %421 = vmatpush1.bf16.msra.mxu0 0
        %422 = vmatprep.subr.bf16.mxu0 0
        %423 = vmatpush1.bf16.msra.mxu0 0
        %424 = vmatprep.subr.bf16.mxu0 0
        %425 = vmatpush1.bf16.msra.mxu0 0
        %426 = vmatprep.subr.bf16.mxu0 0
        %427 = vmatpush1.bf16.msra.mxu0 0
        %428 = vmatprep.subr.bf16.mxu0 0
        %429 = vmatpush1.bf16.msra.mxu0 0
        %430 = vmatprep.subr.bf16.mxu0 0
        %431 = vmatpush1.bf16.msra.mxu0 0
        %432 = vmatprep.subr.bf16.mxu0 0
        %433 = vmatpush1.bf16.msra.mxu0 0
        %434 = vmatprep.mubr.bf16.mxu0 0
        %435 = vmatmul.mubr.bf16.gmra.mrb[0].mxu0 %v339
        %v436 = vpop.f32.mrb[0].mxu0
        %v437 = vadd.f32 %v400, %v436
        %v438 = vpop.f32.mrb[0].mxu0
        %v439 = vpop.f32.mrb[0].mxu0
        %v440 = vadd.f32 %v400, %v439
        %v441 = vpop.f32.mrb[0].mxu0
        %442 = vmatprep.mubr.bf16.mxu0 0
        %443 = vmatmul.mubr.bf16.gmra.mrb[0].mxu0 %v340
        %v444 = vpop.f32.mrb[0].mxu0
        %v445 = vadd.f32 %v400, %v444
        %v446 = vpop.f32.mrb[0].mxu0
        %v447 = vpop.f32.mrb[0].mxu0
        %v448 = vadd.f32 %v400, %v447
        %v449 = vpop.f32.mrb[0].mxu0
        %450 = vmatprep.mubr.bf16.mxu0 0
        %451 = vmatmul.mubr.bf16.gmra.mrb[0].mxu0 %v341
        %v452 = vpop.f32.mrb[0].mxu0
        %v453 = vadd.f32 %v400, %v452
        %v454 = vpop.f32.mrb[0].mxu0
        %v455 = vpop.f32.mrb[0].mxu0
        %v456 = vadd.f32 %v400, %v455
        %v457 = vpop.f32.mrb[0].mxu0
        %458 = vmatprep.mubr.bf16.mxu0 0
        %459 = vmatmul.mubr.bf16.gmra.mrb[0].mxu0 %v342
        %v460 = vpop.f32.mrb[0].mxu0
        %v461 = vadd.f32 %v400, %v460
        %v462 = vpop.f32.mrb[0].mxu0
        %v463 = vpop.f32.mrb[0].mxu0
        %v464 = vadd.f32 %v400, %v463
        %v465 = vpop.f32.mrb[0].mxu0
        %466 = vmatprep.mubr.bf16.mxu0 0
        %467 = vmatmul.mubr.bf16.gmra.mrb[0].mxu0 %v343
        %v468 = vpop.f32.mrb[0].mxu0
        %v469 = vadd.f32 %v400, %v468
        %v470 = vpop.f32.mrb[0].mxu0
        %v471 = vpop.f32.mrb[0].mxu0
        %v472 = vadd.f32 %v400, %v471
        %v473 = vpop.f32.mrb[0].mxu0
        %474 = vmatprep.mubr.bf16.mxu0 0
        %475 = vmatmul.mubr.bf16.gmra.mrb[0].mxu0 %v344
        %v476 = vpop.f32.mrb[0].mxu0
        %v477 = vadd.f32 %v400, %v476
        %v478 = vpop.f32.mrb[0].mxu0
        %v479 = vpop.f32.mrb[0].mxu0
        %v480 = vadd.f32 %v400, %v479
        %v481 = vpop.f32.mrb[0].mxu0
        %482 = vmatprep.mubr.bf16.mxu0 0
        %483 = vmatmul.mubr.bf16.gmra.mrb[0].mxu0 %v345
        %v484 = vpop.f32.mrb[0].mxu0
        %v485 = vadd.f32 %v400, %v484
        %v486 = vpop.f32.mrb[0].mxu0
        %v487 = vpop.f32.mrb[0].mxu0
        %v488 = vadd.f32 %v400, %v487
        %v489 = vpop.f32.mrb[0].mxu0
        %490 = vmatprep.mubr.bf16.mxu0 0
        %491 = vmatmul.mubr.bf16.gmra.mrb[0].mxu0 %v346
        %v492 = vpop.f32.mrb[0].mxu0
        %v493 = vadd.f32 %v400, %v492
        %v494 = vpop.f32.mrb[0].mxu0
        %v495 = vpop.f32.mrb[0].mxu0
        %v496 = vadd.f32 %v400, %v495
        %v497 = vpop.f32.mrb[0].mxu0
        %498 = vmatprep.mubr.bf16.mxu0 0
        %499 = vmatmul.mubr.bf16.gmra.mrb[0].mxu0 %v347
        %v500 = vpop.f32.mrb[0].mxu0
        %v501 = vadd.f32 %v400, %v500
        %v502 = vpop.f32.mrb[0].mxu0
        %v503 = vpop.f32.mrb[0].mxu0
        %v504 = vadd.f32 %v400, %v503
        %v505 = vpop.f32.mrb[0].mxu0
        %506 = vmatprep.mubr.bf16.mxu0 0
        %507 = vmatmul.mubr.bf16.gmra.mrb[0].mxu0 %v348
        %v508 = vpop.f32.mrb[0].mxu0
        %v509 = vadd.f32 %v400, %v508
        %v510 = vpop.f32.mrb[0].mxu0
        %v511 = vpop.f32.mrb[0].mxu0
        %v512 = vadd.f32 %v400, %v511
        %v513 = vpop.f32.mrb[0].mxu0
        %514 = vmatprep.mubr.bf16.mxu0 0
        %515 = vmatmul.mubr.bf16.gmra.mrb[0].mxu0 %v349
        %v516 = vpop.f32.mrb[0].mxu0
        %v517 = vadd.f32 %v400, %v516
        %v518 = vpop.f32.mrb[0].mxu0
        %v519 = vpop.f32.mrb[0].mxu0
        %v520 = vadd.f32 %v400, %v519
        %v521 = vpop.f32.mrb[0].mxu0
        %522 = vmatprep.mubr.bf16.mxu0 0
        %523 = vmatmul.mubr.bf16.gmra.mrb[0].mxu0 %v350
        %v524 = vpop.f32.mrb[0].mxu0
        %v525 = vadd.f32 %v400, %v524
        %v526 = vpop.f32.mrb[0].mxu0
        %v527 = vpop.f32.mrb[0].mxu0
        %v528 = vadd.f32 %v400, %v527
        %v529 = vpop.f32.mrb[0].mxu0
        %530 = vmatprep.mubr.bf16.mxu0 0
        %531 = vmatmul.mubr.bf16.gmra.mrb[0].mxu0 %v351
        %v532 = vpop.f32.mrb[0].mxu0
        %v533 = vadd.f32 %v400, %v532
        %v534 = vpop.f32.mrb[0].mxu0
        %v535 = vpop.f32.mrb[0].mxu0
        %v536 = vadd.f32 %v400, %v535
        %v537 = vpop.f32.mrb[0].mxu0
        %538 = vmatprep.mubr.bf16.mxu0 0
        %539 = vmatmul.mubr.bf16.gmra.mrb[0].mxu0 %v352
        %v540 = vpop.f32.mrb[0].mxu0
        %v541 = vadd.f32 %v400, %v540
        %v542 = vpop.f32.mrb[0].mxu0
        %v543 = vpop.f32.mrb[0].mxu0
        %v544 = vadd.f32 %v400, %v543
        %v545 = vpop.f32.mrb[0].mxu0
        %546 = vmatprep.mubr.bf16.mxu0 0
        %547 = vmatmul.mubr.bf16.gmra.mrb[0].mxu0 %v353
        %v548 = vpop.f32.mrb[0].mxu0
        %v549 = vadd.f32 %v400, %v548
        %v550 = vpop.f32.mrb[0].mxu0
        %v551 = vpop.f32.mrb[0].mxu0
        %v552 = vadd.f32 %v400, %v551
        %v553 = vpop.f32.mrb[0].mxu0
        %554 = vmatprep.mubr.bf16.mxu0 0
        %555 = vmatmul.mubr.bf16.gmra.mrb[0].mxu0 %v354
        %v556 = vpop.f32.mrb[0].mxu0
        %v557 = vadd.f32 %v400, %v556
        %v558 = vpop.f32.mrb[0].mxu0
        %v559 = vpop.f32.mrb[0].mxu0
        %v560 = vadd.f32 %v400, %v559
        %v561 = vpop.f32.mrb[0].mxu0
        %562 = vmatprep.mubr.bf16.mxu0 0
        %563 = vmatmul.mubr.bf16.gmra.mrb[0].mxu0 %v355
        %v564 = vpop.f32.mrb[0].mxu0
        %v565 = vadd.f32 %v400, %v564
        %v566 = vpop.f32.mrb[0].mxu0
        %v567 = vpop.f32.mrb[0].mxu0
        %v568 = vadd.f32 %v400, %v567
        %v569 = vpop.f32.mrb[0].mxu0
        %570 = vmatprep.mubr.bf16.mxu0 0
        %571 = vmatmul.mubr.bf16.gmra.mrb[0].mxu0 %v356
        %v572 = vpop.f32.mrb[0].mxu0
        %v573 = vadd.f32 %v400, %v572
        %v574 = vpop.f32.mrb[0].mxu0
        %v575 = vpop.f32.mrb[0].mxu0
        %v576 = vadd.f32 %v400, %v575
        %v577 = vpop.f32.mrb[0].mxu0
        %578 = vmatprep.mubr.bf16.mxu0 0
        %579 = vmatmul.mubr.bf16.gmra.mrb[0].mxu0 %v357
        %v580 = vpop.f32.mrb[0].mxu0
        %v581 = vadd.f32 %v400, %v580
        %v582 = vpop.f32.mrb[0].mxu0
        %v583 = vpop.f32.mrb[0].mxu0
        %v584 = vadd.f32 %v400, %v583
        %v585 = vpop.f32.mrb[0].mxu0
        %586 = vmatprep.mubr.bf16.mxu0 0
        %587 = vmatmul.mubr.bf16.gmra.mrb[0].mxu0 %v358
        %v588 = vpop.f32.mrb[0].mxu0
        %v589 = vadd.f32 %v400, %v588
        %v590 = vpop.f32.mrb[0].mxu0
        %v591 = vpop.f32.mrb[0].mxu0
        %v592 = vadd.f32 %v400, %v591
        %v593 = vpop.f32.mrb[0].mxu0
        %594 = vmatprep.mubr.bf16.mxu0 0
        %595 = vmatmul.mubr.bf16.gmra.mrb[0].mxu0 %v359
        %v596 = vpop.f32.mrb[0].mxu0
        %v597 = vadd.f32 %v400, %v596
        %v598 = vpop.f32.mrb[0].mxu0
        %v599 = vpop.f32.mrb[0].mxu0
        %v600 = vadd.f32 %v400, %v599
        %v601 = vpop.f32.mrb[0].mxu0
        %602 = vmatprep.mubr.bf16.mxu0 0
        %603 = vmatmul.mubr.bf16.gmra.mrb[0].mxu0 %v360
        %v604 = vpop.f32.mrb[0].mxu0
        %v605 = vadd.f32 %v400, %v604
        %v606 = vpop.f32.mrb[0].mxu0
        %v607 = vpop.f32.mrb[0].mxu0
        %v608 = vadd.f32 %v400, %v607
        %v609 = vpop.f32.mrb[0].mxu0
        %610 = vmatprep.mubr.bf16.mxu0 0
        %611 = vmatmul.mubr.bf16.gmra.mrb[0].mxu0 %v361
        %v612 = vpop.f32.mrb[0].mxu0
        %v613 = vadd.f32 %v400, %v612
        %v614 = vpop.f32.mrb[0].mxu0
        %v615 = vpop.f32.mrb[0].mxu0
        %v616 = vadd.f32 %v400, %v615
        %v617 = vpop.f32.mrb[0].mxu0
        %618 = vmatprep.mubr.bf16.mxu0 0
        %619 = vmatmul.mubr.bf16.gmra.mrb[0].mxu0 %v362
        %v620 = vpop.f32.mrb[0].mxu0
        %v621 = vadd.f32 %v400, %v620
        %v622 = vpop.f32.mrb[0].mxu0
        %v623 = vpop.f32.mrb[0].mxu0
        %v624 = vadd.f32 %v400, %v623
        %v625 = vpop.f32.mrb[0].mxu0
        %626 = vmatprep.mubr.bf16.mxu0 0
        %627 = vmatmul.mubr.bf16.gmra.mrb[0].mxu0 %v363
        %v628 = vpop.f32.mrb[0].mxu0
        %v629 = vadd.f32 %v400, %v628
        %v630 = vpop.f32.mrb[0].mxu0
        %v631 = vpop.f32.mrb[0].mxu0
        %v632 = vadd.f32 %v400, %v631
        %v633 = vpop.f32.mrb[0].mxu0
        %634 = vmatprep.mubr.bf16.mxu0 0
        %635 = vmatmul.mubr.bf16.gmra.mrb[0].mxu0 %v364
        %v636 = vpop.f32.mrb[0].mxu0
        %v637 = vadd.f32 %v400, %v636
        %v638 = vpop.f32.mrb[0].mxu0
        %v639 = vpop.f32.mrb[0].mxu0
        %v640 = vadd.f32 %v400, %v639
        %v641 = vpop.f32.mrb[0].mxu0
        %642 = vmatprep.mubr.bf16.mxu0 0
        %643 = vmatmul.mubr.bf16.gmra.mrb[0].mxu0 %v365
        %v644 = vpop.f32.mrb[0].mxu0
        %v645 = vadd.f32 %v400, %v644
        %v646 = vpop.f32.mrb[0].mxu0
        %v647 = vpop.f32.mrb[0].mxu0
        %v648 = vadd.f32 %v400, %v647
        %v649 = vpop.f32.mrb[0].mxu0
        %650 = vmatprep.mubr.bf16.mxu0 0
        %651 = vmatmul.mubr.bf16.gmra.mrb[0].mxu0 %v366
        %v652 = vpop.f32.mrb[0].mxu0
        %v653 = vadd.f32 %v400, %v652
        %v654 = vpop.f32.mrb[0].mxu0
        %v655 = vpop.f32.mrb[0].mxu0
        %v656 = vadd.f32 %v400, %v655
        %v657 = vpop.f32.mrb[0].mxu0
        %658 = vmatprep.mubr.bf16.mxu0 0
        %659 = vmatmul.mubr.bf16.gmra.mrb[0].mxu0 %v367
        %v660 = vpop.f32.mrb[0].mxu0
        %v661 = vadd.f32 %v400, %v660
        %v662 = vpop.f32.mrb[0].mxu0
        %v663 = vpop.f32.mrb[0].mxu0
        %v664 = vadd.f32 %v400, %v663
        %v665 = vpop.f32.mrb[0].mxu0
        %666 = vmatprep.mubr.bf16.mxu0 0
        %667 = vmatmul.mubr.bf16.gmra.mrb[0].mxu0 %v368
        %v668 = vpop.f32.mrb[0].mxu0
        %v669 = vadd.f32 %v400, %v668
        %v670 = vpop.f32.mrb[0].mxu0
        %v671 = vpop.f32.mrb[0].mxu0
        %v672 = vadd.f32 %v400, %v671
        %v673 = vpop.f32.mrb[0].mxu0
        %674 = vmatprep.mubr.bf16.mxu0 0
        %675 = vmatmul.mubr.bf16.gmra.mrb[0].mxu0 %v369
        %v676 = vpop.f32.mrb[0].mxu0
        %v677 = vadd.f32 %v400, %v676
        %v678 = vpop.f32.mrb[0].mxu0
        %v679 = vpop.f32.mrb[0].mxu0
        %v680 = vadd.f32 %v400, %v679
        %v681 = vpop.f32.mrb[0].mxu0
        %682 = vmatprep.mubr.bf16.mxu0 0
        %683 = vmatmul.mubr.bf16.gmra.mrb[0].mxu0 %v370
        %v684 = vpop.f32.mrb[0].mxu0
        %v685 = vadd.f32 %v400, %v684
        %v686 = vpop.f32.mrb[0].mxu0
        %v687 = vpop.f32.mrb[0].mxu0
        %v688 = vadd.f32 %v400, %v687
        %v689 = vpop.f32.mrb[0].mxu0
        %690 = vdwg.mxu0
        %v691 = vmax.f32 %v437, 0.0
        %v692 = vmax.f32 %v440, 0.0
        %v693 = vmax.f32 %v445, 0.0
        %v694 = vmax.f32 %v448, 0.0
        %v695 = vmax.f32 %v453, 0.0
        %v696 = vmax.f32 %v456, 0.0
        %v697 = vmax.f32 %v461, 0.0
        %v698 = vmax.f32 %v464, 0.0
        %v699 = vmax.f32 %v469, 0.0
        %v700 = vmax.f32 %v472, 0.0
        %v701 = vmax.f32 %v477, 0.0
        %v702 = vmax.f32 %v480, 0.0
        %v703 = vmax.f32 %v485, 0.0
        %v704 = vmax.f32 %v488, 0.0
        %v705 = vmax.f32 %v493, 0.0
        %v706 = vmax.f32 %v496, 0.0
        %v707 = vmax.f32 %v501, 0.0
        %v708 = vmax.f32 %v504, 0.0
        %v709 = vmax.f32 %v509, 0.0
        %v710 = vmax.f32 %v512, 0.0
        %v711 = vmax.f32 %v517, 0.0
        %v712 = vmax.f32 %v520, 0.0
        %v713 = vmax.f32 %v525, 0.0
        %v714 = vmax.f32 %v528, 0.0
        %v715 = vmax.f32 %v533, 0.0
        %v716 = vmax.f32 %v536, 0.0
        %v717 = vmax.f32 %v541, 0.0
        %v718 = vmax.f32 %v544, 0.0
        %v719 = vmax.f32 %v549, 0.0
        %v720 = vmax.f32 %v552, 0.0
        %v721 = vmax.f32 %v557, 0.0
        %v722 = vmax.f32 %v560, 0.0
        %v723 = vmax.f32 %v565, 0.0
        %v724 = vmax.f32 %v568, 0.0
        %v725 = vmax.f32 %v573, 0.0
        %v726 = vmax.f32 %v576, 0.0
        %v727 = vmax.f32 %v581, 0.0
        %v728 = vmax.f32 %v584, 0.0
        %v729 = vmax.f32 %v589, 0.0
        %v730 = vmax.f32 %v592, 0.0
        %v731 = vmax.f32 %v597, 0.0
        %v732 = vmax.f32 %v600, 0.0
        %v733 = vmax.f32 %v605, 0.0
        %v734 = vmax.f32 %v608, 0.0
        %v735 = vmax.f32 %v613, 0.0
        %v736 = vmax.f32 %v616, 0.0
        %v737 = vmax.f32 %v621, 0.0
        %v738 = vmax.f32 %v624, 0.0
        %v739 = vmax.f32 %v629, 0.0
        %v740 = vmax.f32 %v632, 0.0
        %v741 = vmax.f32 %v637, 0.0
        %v742 = vmax.f32 %v640, 0.0
        %v743 = vmax.f32 %v645, 0.0
        %v744 = vmax.f32 %v648, 0.0
        %v745 = vmax.f32 %v653, 0.0
        %v746 = vmax.f32 %v656, 0.0
        %v747 = vmax.f32 %v661, 0.0
        %v748 = vmax.f32 %v664, 0.0
        %v749 = vmax.f32 %v669, 0.0
        %v750 = vmax.f32 %v672, 0.0
        %v751 = vmax.f32 %v677, 0.0
        %v752 = vmax.f32 %v680, 0.0
        %v753 = vmax.f32 %v685, 0.0
        %v754 = vmax.f32 %v688, 0.0
        %v755 = vld [vmem:[#allocation7] sm:$0xff]
        %v756 = vld [vmem:[#allocation7 + $0x8] sm:$0xff]
        %v757 = vld [vmem:[#allocation7 + $0x10] sm:$0xff]
        %v758 = vld [vmem:[#allocation7 + $0x18] sm:$0xff]
        %v759 = vld [vmem:[#allocation7 + $0x20] sm:$0xff]
        %v760 = vld [vmem:[#allocation7 + $0x28] sm:$0xff]
        %v761 = vld [vmem:[#allocation7 + $0x30] sm:$0xff]
        %v762 = vld [vmem:[#allocation7 + $0x38] sm:$0xff]
        %v763 = vld [vmem:[#allocation7 + $0x40] sm:$0xff]
        %v764 = vld [vmem:[#allocation7 + $0x48] sm:$0xff]
        %v765 = vld [vmem:[#allocation7 + $0x50] sm:$0xff]
        %v766 = vld [vmem:[#allocation7 + $0x58] sm:$0xff]
        %v767 = vld [vmem:[#allocation7 + $0x60] sm:$0xff]
        %v768 = vld [vmem:[#allocation7 + $0x68] sm:$0xff]
        %v769 = vld [vmem:[#allocation7 + $0x70] sm:$0xff]
        %v770 = vld [vmem:[#allocation7 + $0x78] sm:$0xff]
        %v771 = vpack.c.bf16 %v756, %v755
        %v772 = vpack.c.bf16 %v758, %v757
        %v773 = vpack.c.bf16 %v760, %v759
        %v774 = vpack.c.bf16 %v762, %v761
        %v775 = vpack.c.bf16 %v764, %v763
        %v776 = vpack.c.bf16 %v766, %v765
        %v777 = vpack.c.bf16 %v768, %v767
        %v778 = vpack.c.bf16 %v770, %v769
        %v779 = vpack.c.bf16 %v692, %v691
        %v780 = vpack.c.bf16 %v694, %v693
        %v781 = vpack.c.bf16 %v696, %v695
        %v782 = vpack.c.bf16 %v698, %v697
        %v783 = vpack.c.bf16 %v700, %v699
        %v784 = vpack.c.bf16 %v702, %v701
        %v785 = vpack.c.bf16 %v704, %v703
        %v786 = vpack.c.bf16 %v706, %v705
        %v787 = vpack.c.bf16 %v708, %v707
        %v788 = vpack.c.bf16 %v710, %v709
        %v789 = vpack.c.bf16 %v712, %v711
        %v790 = vpack.c.bf16 %v714, %v713
        %v791 = vpack.c.bf16 %v716, %v715
        %v792 = vpack.c.bf16 %v718, %v717
        %v793 = vpack.c.bf16 %v720, %v719
        %v794 = vpack.c.bf16 %v722, %v721
        %v795 = vpack.c.bf16 %v724, %v723
        %v796 = vpack.c.bf16 %v726, %v725
        %v797 = vpack.c.bf16 %v728, %v727
        %v798 = vpack.c.bf16 %v730, %v729
        %v799 = vpack.c.bf16 %v732, %v731
        %v800 = vpack.c.bf16 %v734, %v733
        %v801 = vpack.c.bf16 %v736, %v735
        %v802 = vpack.c.bf16 %v738, %v737
        %v803 = vpack.c.bf16 %v740, %v739
        %v804 = vpack.c.bf16 %v742, %v741
        %v805 = vpack.c.bf16 %v744, %v743
        %v806 = vpack.c.bf16 %v746, %v745
        %v807 = vpack.c.bf16 %v748, %v747
        %v808 = vpack.c.bf16 %v750, %v749
        %v809 = vpack.c.bf16 %v752, %v751
        %v810 = vpack.c.bf16 %v754, %v753
        %v811 = vld [vmem:[%s4] sm:$0x1]
        %v813 = vlaneseq
        %v814 = vshrl.u32 %v813, 7
        %v815 = vsub.s32 0, %v814
        %v816 = vrot.slane %v811, %v815
        %818 = vmatprep.subr.bf16.mxu0 0
        %819 = vmatpush1.bf16.msra.mxu0 %v771
        %820 = vmatprep.subr.bf16.mxu0 0
        %821 = vmatpush1.bf16.msra.mxu0 %v772
        %822 = vmatprep.subr.bf16.mxu0 0
        %823 = vmatpush1.bf16.msra.mxu0 %v773
        %824 = vmatprep.subr.bf16.mxu0 0
        %825 = vmatpush1.bf16.msra.mxu0 %v774
        %826 = vmatprep.subr.bf16.mxu0 0
        %827 = vmatpush1.bf16.msra.mxu0 %v775
        %828 = vmatprep.subr.bf16.mxu0 0
        %829 = vmatpush1.bf16.msra.mxu0 %v776
        %830 = vmatprep.subr.bf16.mxu0 0
        %831 = vmatpush1.bf16.msra.mxu0 %v777
        %832 = vmatprep.subr.bf16.mxu0 0
        %833 = vmatpush1.bf16.msra.mxu0 %v778
        %834 = vmatprep.subr.bf16.mxu0 0
        %835 = vmatpush1.bf16.msra.mxu0 0
        %836 = vmatprep.subr.bf16.mxu0 0
        %837 = vmatpush1.bf16.msra.mxu0 0
        %838 = vmatprep.subr.bf16.mxu0 0
        %839 = vmatpush1.bf16.msra.mxu0 0
        %840 = vmatprep.subr.bf16.mxu0 0
        %841 = vmatpush1.bf16.msra.mxu0 0
        %842 = vmatprep.subr.bf16.mxu0 0
        %843 = vmatpush1.bf16.msra.mxu0 0
        %844 = vmatprep.subr.bf16.mxu0 0
        %845 = vmatpush1.bf16.msra.mxu0 0
        %846 = vmatprep.subr.bf16.mxu0 0
        %847 = vmatpush1.bf16.msra.mxu0 0
        %848 = vmatprep.subr.bf16.mxu0 0
        %849 = vmatpush1.bf16.msra.mxu0 0
        %850 = vmatprep.mubr.bf16.mxu0 0
        %851 = vmatmul.mubr.bf16.gmra.mrb[0].mxu0 %v779
        %v852 = vpop.f32.mrb[0].mxu0
        %v853 = vadd.f32 %v816, %v852
        %v854 = vpop.f32.mrb[0].mxu0
        %v855 = vpop.f32.mrb[0].mxu0
        %v856 = vadd.f32 %v816, %v855
        %v857 = vpop.f32.mrb[0].mxu0
        %858 = vmatprep.mubr.bf16.mxu0 0
        %859 = vmatmul.mubr.bf16.gmra.mrb[0].mxu0 %v780
        %v860 = vpop.f32.mrb[0].mxu0
        %v861 = vadd.f32 %v816, %v860
        %v862 = vpop.f32.mrb[0].mxu0
        %v863 = vpop.f32.mrb[0].mxu0
        %v864 = vadd.f32 %v816, %v863
        %v865 = vpop.f32.mrb[0].mxu0
        %866 = vmatprep.mubr.bf16.mxu0 0
        %867 = vmatmul.mubr.bf16.gmra.mrb[0].mxu0 %v781
        %v868 = vpop.f32.mrb[0].mxu0
        %v869 = vadd.f32 %v816, %v868
        %v870 = vpop.f32.mrb[0].mxu0
        %v871 = vpop.f32.mrb[0].mxu0
        %v872 = vadd.f32 %v816, %v871
        %v873 = vpop.f32.mrb[0].mxu0
        %874 = vmatprep.mubr.bf16.mxu0 0
        %875 = vmatmul.mubr.bf16.gmra.mrb[0].mxu0 %v782
        %v876 = vpop.f32.mrb[0].mxu0
        %v877 = vadd.f32 %v816, %v876
        %v878 = vpop.f32.mrb[0].mxu0
        %v879 = vpop.f32.mrb[0].mxu0
        %v880 = vadd.f32 %v816, %v879
        %v881 = vpop.f32.mrb[0].mxu0
        %882 = vmatprep.mubr.bf16.mxu0 0
        %883 = vmatmul.mubr.bf16.gmra.mrb[0].mxu0 %v783
        %v884 = vpop.f32.mrb[0].mxu0
        %v885 = vadd.f32 %v816, %v884
        %v886 = vpop.f32.mrb[0].mxu0
        %v887 = vpop.f32.mrb[0].mxu0
        %v888 = vadd.f32 %v816, %v887
        %v889 = vpop.f32.mrb[0].mxu0
        %890 = vmatprep.mubr.bf16.mxu0 0
        %891 = vmatmul.mubr.bf16.gmra.mrb[0].mxu0 %v784
        %v892 = vpop.f32.mrb[0].mxu0
        %v893 = vadd.f32 %v816, %v892
        %v894 = vpop.f32.mrb[0].mxu0
        %v895 = vpop.f32.mrb[0].mxu0
        %v896 = vadd.f32 %v816, %v895
        %v897 = vpop.f32.mrb[0].mxu0
        %898 = vmatprep.mubr.bf16.mxu0 0
        %899 = vmatmul.mubr.bf16.gmra.mrb[0].mxu0 %v785
        %v900 = vpop.f32.mrb[0].mxu0
        %v901 = vadd.f32 %v816, %v900
        %v902 = vpop.f32.mrb[0].mxu0
        %v903 = vpop.f32.mrb[0].mxu0
        %v904 = vadd.f32 %v816, %v903
        %v905 = vpop.f32.mrb[0].mxu0
        %906 = vmatprep.mubr.bf16.mxu0 0
        %907 = vmatmul.mubr.bf16.gmra.mrb[0].mxu0 %v786
        %v908 = vpop.f32.mrb[0].mxu0
        %v909 = vadd.f32 %v816, %v908
        %v910 = vpop.f32.mrb[0].mxu0
        %v911 = vpop.f32.mrb[0].mxu0
        %v912 = vadd.f32 %v816, %v911
        %v913 = vpop.f32.mrb[0].mxu0
        %914 = vmatprep.mubr.bf16.mxu0 0
        %915 = vmatmul.mubr.bf16.gmra.mrb[0].mxu0 %v787
        %v916 = vpop.f32.mrb[0].mxu0
        %v917 = vadd.f32 %v816, %v916
        %v918 = vpop.f32.mrb[0].mxu0
        %v919 = vpop.f32.mrb[0].mxu0
        %v920 = vadd.f32 %v816, %v919
        %v921 = vpop.f32.mrb[0].mxu0
        %922 = vmatprep.mubr.bf16.mxu0 0
        %923 = vmatmul.mubr.bf16.gmra.mrb[0].mxu0 %v788
        %v924 = vpop.f32.mrb[0].mxu0
        %v925 = vadd.f32 %v816, %v924
        %v926 = vpop.f32.mrb[0].mxu0
        %v927 = vpop.f32.mrb[0].mxu0
        %v928 = vadd.f32 %v816, %v927
        %v929 = vpop.f32.mrb[0].mxu0
        %930 = vmatprep.mubr.bf16.mxu0 0
        %931 = vmatmul.mubr.bf16.gmra.mrb[0].mxu0 %v789
        %v932 = vpop.f32.mrb[0].mxu0
        %v933 = vadd.f32 %v816, %v932
        %v934 = vpop.f32.mrb[0].mxu0
        %v935 = vpop.f32.mrb[0].mxu0
        %v936 = vadd.f32 %v816, %v935
        %v937 = vpop.f32.mrb[0].mxu0
        %938 = vmatprep.mubr.bf16.mxu0 0
        %939 = vmatmul.mubr.bf16.gmra.mrb[0].mxu0 %v790
        %v940 = vpop.f32.mrb[0].mxu0
        %v941 = vadd.f32 %v816, %v940
        %v942 = vpop.f32.mrb[0].mxu0
        %v943 = vpop.f32.mrb[0].mxu0
        %v944 = vadd.f32 %v816, %v943
        %v945 = vpop.f32.mrb[0].mxu0
        %946 = vmatprep.mubr.bf16.mxu0 0
        %947 = vmatmul.mubr.bf16.gmra.mrb[0].mxu0 %v791
        %v948 = vpop.f32.mrb[0].mxu0
        %v949 = vadd.f32 %v816, %v948
        %v950 = vpop.f32.mrb[0].mxu0
        %v951 = vpop.f32.mrb[0].mxu0
        %v952 = vadd.f32 %v816, %v951
        %v953 = vpop.f32.mrb[0].mxu0
        %954 = vmatprep.mubr.bf16.mxu0 0
        %955 = vmatmul.mubr.bf16.gmra.mrb[0].mxu0 %v792
        %v956 = vpop.f32.mrb[0].mxu0
        %v957 = vadd.f32 %v816, %v956
        %v958 = vpop.f32.mrb[0].mxu0
        %v959 = vpop.f32.mrb[0].mxu0
        %v960 = vadd.f32 %v816, %v959
        %v961 = vpop.f32.mrb[0].mxu0
        %962 = vmatprep.mubr.bf16.mxu0 0
        %963 = vmatmul.mubr.bf16.gmra.mrb[0].mxu0 %v793
        %v964 = vpop.f32.mrb[0].mxu0
        %v965 = vadd.f32 %v816, %v964
        %v966 = vpop.f32.mrb[0].mxu0
        %v967 = vpop.f32.mrb[0].mxu0
        %v968 = vadd.f32 %v816, %v967
        %v969 = vpop.f32.mrb[0].mxu0
        %970 = vmatprep.mubr.bf16.mxu0 0
        %971 = vmatmul.mubr.bf16.gmra.mrb[0].mxu0 %v794
        %v972 = vpop.f32.mrb[0].mxu0
        %v973 = vadd.f32 %v816, %v972
        %v974 = vpop.f32.mrb[0].mxu0
        %v975 = vpop.f32.mrb[0].mxu0
        %v976 = vadd.f32 %v816, %v975
        %v977 = vpop.f32.mrb[0].mxu0
        %978 = vmatprep.mubr.bf16.mxu0 0
        %979 = vmatmul.mubr.bf16.gmra.mrb[0].mxu0 %v795
        %v980 = vpop.f32.mrb[0].mxu0
        %v981 = vadd.f32 %v816, %v980
        %v982 = vpop.f32.mrb[0].mxu0
        %v983 = vpop.f32.mrb[0].mxu0
        %v984 = vadd.f32 %v816, %v983
        %v985 = vpop.f32.mrb[0].mxu0
        %986 = vmatprep.mubr.bf16.mxu0 0
        %987 = vmatmul.mubr.bf16.gmra.mrb[0].mxu0 %v796
        %v988 = vpop.f32.mrb[0].mxu0
        %v989 = vadd.f32 %v816, %v988
        %v990 = vpop.f32.mrb[0].mxu0
        %v991 = vpop.f32.mrb[0].mxu0
        %v992 = vadd.f32 %v816, %v991
        %v993 = vpop.f32.mrb[0].mxu0
        %994 = vmatprep.mubr.bf16.mxu0 0
        %995 = vmatmul.mubr.bf16.gmra.mrb[0].mxu0 %v797
        %v996 = vpop.f32.mrb[0].mxu0
        %v997 = vadd.f32 %v816, %v996
        %v998 = vpop.f32.mrb[0].mxu0
        %v999 = vpop.f32.mrb[0].mxu0
        %v1000 = vadd.f32 %v816, %v999
        %v1001 = vpop.f32.mrb[0].mxu0
        %1002 = vmatprep.mubr.bf16.mxu0 0
        %1003 = vmatmul.mubr.bf16.gmra.mrb[0].mxu0 %v798
        %v1004 = vpop.f32.mrb[0].mxu0
        %v1005 = vadd.f32 %v816, %v1004
        %v1006 = vpop.f32.mrb[0].mxu0
        %v1007 = vpop.f32.mrb[0].mxu0
        %v1008 = vadd.f32 %v816, %v1007
        %v1009 = vpop.f32.mrb[0].mxu0
        %1010 = vmatprep.mubr.bf16.mxu0 0
        %1011 = vmatmul.mubr.bf16.gmra.mrb[0].mxu0 %v799
        %v1012 = vpop.f32.mrb[0].mxu0
        %v1013 = vadd.f32 %v816, %v1012
        %v1014 = vpop.f32.mrb[0].mxu0
        %v1015 = vpop.f32.mrb[0].mxu0
        %v1016 = vadd.f32 %v816, %v1015
        %v1017 = vpop.f32.mrb[0].mxu0
        %1018 = vmatprep.mubr.bf16.mxu0 0
        %1019 = vmatmul.mubr.bf16.gmra.mrb[0].mxu0 %v800
        %v1020 = vpop.f32.mrb[0].mxu0
        %v1021 = vadd.f32 %v816, %v1020
        %v1022 = vpop.f32.mrb[0].mxu0
        %v1023 = vpop.f32.mrb[0].mxu0
        %v1024 = vadd.f32 %v816, %v1023
        %v1025 = vpop.f32.mrb[0].mxu0
        %1026 = vmatprep.mubr.bf16.mxu0 0
        %1027 = vmatmul.mubr.bf16.gmra.mrb[0].mxu0 %v801
        %v1028 = vpop.f32.mrb[0].mxu0
        %v1029 = vadd.f32 %v816, %v1028
        %v1030 = vpop.f32.mrb[0].mxu0
        %v1031 = vpop.f32.mrb[0].mxu0
        %v1032 = vadd.f32 %v816, %v1031
        %v1033 = vpop.f32.mrb[0].mxu0
        %1034 = vmatprep.mubr.bf16.mxu0 0
        %1035 = vmatmul.mubr.bf16.gmra.mrb[0].mxu0 %v802
        %v1036 = vpop.f32.mrb[0].mxu0
        %v1037 = vadd.f32 %v816, %v1036
        %v1038 = vpop.f32.mrb[0].mxu0
        %v1039 = vpop.f32.mrb[0].mxu0
        %v1040 = vadd.f32 %v816, %v1039
        %v1041 = vpop.f32.mrb[0].mxu0
        %1042 = vmatprep.mubr.bf16.mxu0 0
        %1043 = vmatmul.mubr.bf16.gmra.mrb[0].mxu0 %v803
        %v1044 = vpop.f32.mrb[0].mxu0
        %v1045 = vadd.f32 %v816, %v1044
        %v1046 = vpop.f32.mrb[0].mxu0
        %v1047 = vpop.f32.mrb[0].mxu0
        %v1048 = vadd.f32 %v816, %v1047
        %v1049 = vpop.f32.mrb[0].mxu0
        %1050 = vmatprep.mubr.bf16.mxu0 0
        %1051 = vmatmul.mubr.bf16.gmra.mrb[0].mxu0 %v804
        %v1052 = vpop.f32.mrb[0].mxu0
        %v1053 = vadd.f32 %v816, %v1052
        %v1054 = vpop.f32.mrb[0].mxu0
        %v1055 = vpop.f32.mrb[0].mxu0
        %v1056 = vadd.f32 %v816, %v1055
        %v1057 = vpop.f32.mrb[0].mxu0
        %1058 = vmatprep.mubr.bf16.mxu0 0
        %1059 = vmatmul.mubr.bf16.gmra.mrb[0].mxu0 %v805
        %v1060 = vpop.f32.mrb[0].mxu0
        %v1061 = vadd.f32 %v816, %v1060
        %v1062 = vpop.f32.mrb[0].mxu0
        %v1063 = vpop.f32.mrb[0].mxu0
        %v1064 = vadd.f32 %v816, %v1063
        %v1065 = vpop.f32.mrb[0].mxu0
        %1066 = vmatprep.mubr.bf16.mxu0 0
        %1067 = vmatmul.mubr.bf16.gmra.mrb[0].mxu0 %v806
        %v1068 = vpop.f32.mrb[0].mxu0
        %v1069 = vadd.f32 %v816, %v1068
        %v1070 = vpop.f32.mrb[0].mxu0
        %v1071 = vpop.f32.mrb[0].mxu0
        %v1072 = vadd.f32 %v816, %v1071
        %v1073 = vpop.f32.mrb[0].mxu0
        %1074 = vmatprep.mubr.bf16.mxu0 0
        %1075 = vmatmul.mubr.bf16.gmra.mrb[0].mxu0 %v807
        %v1076 = vpop.f32.mrb[0].mxu0
        %v1077 = vadd.f32 %v816, %v1076
        %v1078 = vpop.f32.mrb[0].mxu0
        %v1079 = vpop.f32.mrb[0].mxu0
        %v1080 = vadd.f32 %v816, %v1079
        %v1081 = vpop.f32.mrb[0].mxu0
        %1082 = vmatprep.mubr.bf16.mxu0 0
        %1083 = vmatmul.mubr.bf16.gmra.mrb[0].mxu0 %v808
        %v1084 = vpop.f32.mrb[0].mxu0
        %v1085 = vadd.f32 %v816, %v1084
        %v1086 = vpop.f32.mrb[0].mxu0
        %v1087 = vpop.f32.mrb[0].mxu0
        %v1088 = vadd.f32 %v816, %v1087
        %v1089 = vpop.f32.mrb[0].mxu0
        %1090 = vmatprep.mubr.bf16.mxu0 0
        %1091 = vmatmul.mubr.bf16.gmra.mrb[0].mxu0 %v809
        %v1092 = vpop.f32.mrb[0].mxu0
        %v1093 = vadd.f32 %v816, %v1092
        %v1094 = vpop.f32.mrb[0].mxu0
        %v1095 = vpop.f32.mrb[0].mxu0
        %v1096 = vadd.f32 %v816, %v1095
        %v1097 = vpop.f32.mrb[0].mxu0
        %1098 = vmatprep.mubr.bf16.mxu0 0
        %1099 = vmatmul.mubr.bf16.gmra.mrb[0].mxu0 %v810
        %v1100 = vpop.f32.mrb[0].mxu0
        %v1101 = vadd.f32 %v816, %v1100
        %v1102 = vpop.f32.mrb[0].mxu0
        %v1103 = vpop.f32.mrb[0].mxu0
        %v1104 = vadd.f32 %v816, %v1103
        %v1105 = vpop.f32.mrb[0].mxu0
        %1106 = vdwg.mxu0
        %1107 = vst [vmem:[%s271] sm:$0xff] %v853
        %1108 = vst [vmem:[%s271 + $0x8] sm:$0xff] %v856
        %1109 = vst [vmem:[%s271 + $0x10] sm:$0xff] %v861
        %1110 = vst [vmem:[%s271 + $0x18] sm:$0xff] %v864
        %1111 = vst [vmem:[%s271 + $0x20] sm:$0xff] %v869
        %1112 = vst [vmem:[%s271 + $0x28] sm:$0xff] %v872
        %1113 = vst [vmem:[%s271 + $0x30] sm:$0xff] %v877
        %1114 = vst [vmem:[%s271 + $0x38] sm:$0xff] %v880
        %1115 = vst [vmem:[%s271 + $0x40] sm:$0xff] %v885
        %1116 = vst [vmem:[%s271 + $0x48] sm:$0xff] %v888
        %1117 = vst [vmem:[%s271 + $0x50] sm:$0xff] %v893
        %1118 = vst [vmem:[%s271 + $0x58] sm:$0xff] %v896
        %1119 = vst [vmem:[%s271 + $0x60] sm:$0xff] %v901
        %1120 = vst [vmem:[%s271 + $0x68] sm:$0xff] %v904
        %1121 = vst [vmem:[%s271 + $0x70] sm:$0xff] %v909
        %1122 = vst [vmem:[%s271 + $0x78] sm:$0xff] %v912
        %1123 = vst [vmem:[%s271 + $0x80] sm:$0xff] %v917
        %1124 = vst [vmem:[%s271 + $0x88] sm:$0xff] %v920
        %1125 = vst [vmem:[%s271 + $0x90] sm:$0xff] %v925
        %1126 = vst [vmem:[%s271 + $0x98] sm:$0xff] %v928
        %1127 = vst [vmem:[%s271 + $0xa0] sm:$0xff] %v933
        %1128 = vst [vmem:[%s271 + $0xa8] sm:$0xff] %v936
        %1129 = vst [vmem:[%s271 + $0xb0] sm:$0xff] %v941
        %1130 = vst [vmem:[%s271 + $0xb8] sm:$0xff] %v944
        %1131 = vst [vmem:[%s271 + $0xc0] sm:$0xff] %v949
        %1132 = vst [vmem:[%s271 + $0xc8] sm:$0xff] %v952
        %1133 = vst [vmem:[%s271 + $0xd0] sm:$0xff] %v957
        %1134 = vst [vmem:[%s271 + $0xd8] sm:$0xff] %v960
        %1135 = vst [vmem:[%s271 + $0xe0] sm:$0xff] %v965
        %1136 = vst [vmem:[%s271 + $0xe8] sm:$0xff] %v968
        %1137 = vst [vmem:[%s271 + $0xf0] sm:$0xff] %v973
        %1138 = vst [vmem:[%s271 + $0xf8] sm:$0xff] %v976
        %1139 = vst [vmem:[%s271 + $0x100] sm:$0xff] %v981
        %1140 = vst [vmem:[%s271 + $0x108] sm:$0xff] %v984
        %1141 = vst [vmem:[%s271 + $0x110] sm:$0xff] %v989
        %1142 = vst [vmem:[%s271 + $0x118] sm:$0xff] %v992
        %1143 = vst [vmem:[%s271 + $0x120] sm:$0xff] %v997
        %1144 = vst [vmem:[%s271 + $0x128] sm:$0xff] %v1000
        %1145 = vst [vmem:[%s271 + $0x130] sm:$0xff] %v1005
        %1146 = vst [vmem:[%s271 + $0x138] sm:$0xff] %v1008
        %1147 = vst [vmem:[%s271 + $0x140] sm:$0xff] %v1013
        %1148 = vst [vmem:[%s271 + $0x148] sm:$0xff] %v1016
        %1149 = vst [vmem:[%s271 + $0x150] sm:$0xff] %v1021
        %1150 = vst [vmem:[%s271 + $0x158] sm:$0xff] %v1024
        %1151 = vst [vmem:[%s271 + $0x160] sm:$0xff] %v1029
        %1152 = vst [vmem:[%s271 + $0x168] sm:$0xff] %v1032
        %1153 = vst [vmem:[%s271 + $0x170] sm:$0xff] %v1037
        %1154 = vst [vmem:[%s271 + $0x178] sm:$0xff] %v1040
        %1155 = vst [vmem:[%s271 + $0x180] sm:$0xff] %v1045
        %1156 = vst [vmem:[%s271 + $0x188] sm:$0xff] %v1048
        %1157 = vst [vmem:[%s271 + $0x190] sm:$0xff] %v1053
        %1158 = vst [vmem:[%s271 + $0x198] sm:$0xff] %v1056
        %1159 = vst [vmem:[%s271 + $0x1a0] sm:$0xff] %v1061
        %1160 = vst [vmem:[%s271 + $0x1a8] sm:$0xff] %v1064
        %1161 = vst [vmem:[%s271 + $0x1b0] sm:$0xff] %v1069
        %1162 = vst [vmem:[%s271 + $0x1b8] sm:$0xff] %v1072
        %1163 = vst [vmem:[%s271 + $0x1c0] sm:$0xff] %v1077
        %1164 = vst [vmem:[%s271 + $0x1c8] sm:$0xff] %v1080
        %1165 = vst [vmem:[%s271 + $0x1d0] sm:$0xff] %v1085
        %1166 = vst [vmem:[%s271 + $0x1d8] sm:$0xff] %v1088
        %1167 = vst [vmem:[%s271 + $0x1e0] sm:$0xff] %v1093
        %1168 = vst [vmem:[%s271 + $0x1e8] sm:$0xff] %v1096
        %1169 = vst [vmem:[%s271 + $0x1f0] sm:$0xff] %v1101
        %1170 = vst [vmem:[%s271 + $0x1f8] sm:$0xff] %v1104
        %s1171 = sand.u32 %s141, 1
        %s1172 = scalar_lea.sflag [#allocation4], %s1171
        %s1173 = sand.u32 %s141, 1
        %s1174 = smul.addr %s1173, 512
        %s1175 = scalar_lea.vmem [#allocation8], %s1174
        // Predicated region
        $region53: #{tpu_custom_call.1} parent=39 // pred_check
          %p1176 = pneg %p151
        $region54: #{tpu_custom_call.1} parent=39 // pred_check_branch
          %1178 = sbr.rel (%p1176) target = $region56
        $region55: #{tpu_custom_call.1} parent=39 // pred_region
          %s1179 = smul.u32 64, %s23
          %s1181 = ssub.s32 8192, 8192
          %1182 = vsyncadd %s1172, %s1181
          %s1183 = smul.addr %s1179, 128
          %s1184 = scalar_lea.hbm %s5, %s1183
          %s1185 = sshll.u32 %s1175, 4
          %s1186 = int_to_ptr.vmem [resolvable:$true] %s1185
          %1191 = dma.vmem_to_hbm [thread:$0]  %s1186, 8192, %s1184, %s1172, 128, 128, 8
        $region56: #{tpu_custom_call.1} parent=39 // pred_fallthru
          _
      $region40: #{tpu_custom_call.1} parent=5 // pred_fallthru
        _
      %p1192 = scmp.le.s32.totalorder 2, %s18
      // Predicated region
      $region57: #{tpu_custom_call.1} parent=5 // pred_check
        %p1193 = pneg %p1192
      $region58: #{tpu_custom_call.1} parent=5 // pred_check_branch
        %1195 = sbr.rel (%p1193) target = $region60
      $region59: #{tpu_custom_call.1} parent=5 // pred_region
        %s1196 = ssub.s32 %s18, 2
        // Predicated region
        $region61: #{tpu_custom_call.1} parent=59 // pred_check
          %p1197 = pneg %p157
        $region62: #{tpu_custom_call.1} parent=59 // pred_check_branch
          %1199 = sbr.rel (%p1197) target = $region64
        $region63: #{tpu_custom_call.1} parent=59 // pred_region
          %s1200 = sand.u32 %s142, 1
          %s1201 = scalar_lea.sflag [#allocation4], %s1200
          %s1202 = sand.u32 %s142, 1
          %s1203 = smul.addr %s1202, 512
          %s1204 = scalar_lea.vmem [#allocation8], %s1203
          %1205 = dma.done %s1201, 8192
        $region64: #{tpu_custom_call.1} parent=59 // pred_fallthru
          _
      $region60: #{tpu_custom_call.1} parent=5 // pred_fallthru
        _
    $region6: #{tpu_custom_call.1} parent=1 // loop_footer
      %s22 = sadd.s32 1, %s18
    $region7: #{tpu_custom_call.1} parent=1 // loop_footer_branch
      %17 = sbr.rel target = $region3
    $region8: #{tpu_custom_call.1} parent=1 // loop_exit
      _
    %1206 = vsyncpa [#allocation3], 1
    %s1207 = scalar_lea.sflag [#allocation3], 1
    %1208 = vsyncpa %s1207, 1
    %1209 = vsyncpa [#allocation6], 1
    %1210 = vsyncpa [#allocation4], 1
    %s1211 = scalar_lea.sflag [#allocation4], 1
    %1212 = vsyncpa %s1211, 1

</llo_original>
